<compile_context>
chip_gen: v5e
topology: v5e:2x2
jax: 0.10.0
libtpu: 0.0.40
codegen_flags: <defaults>
</compile_context>

<pallas_src>
import functools

import jax
import jax.numpy as jnp
from jax.experimental import pallas as pl
from jax.experimental.pallas import tpu as pltpu

LANES = 128
TILE_ROWS_MAX = 2048      # (2048, 128) f32 block = 1 MiB per pipeline buffer
MIN_KERNEL_ELEMS = 16384  # below this, plain JAX beats kernel launch overhead


def _detect_num_tensorcores():
    """2 on v7x (2 TensorCores/chip), 1 on v5e/v6e and anything unknown."""
    # TODO(synk): switch to a pltpu.get_tpu_info() core-count query once exposed.
    try:
        kind = jax.devices()[0].device_kind.lower()
    except Exception:
        return 1
    if "v7" in kind or "7x" in kind:
        return 2
    return 1


NUM_PARALLEL = _detect_num_tensorcores()


def _elementwise_loss(x, mode, target, sign):
    """Per-element GAN loss transform (f32 in, f32 out)."""
    if mode == "lsgan":                    # nn.MSELoss vs constant target
        d = x - jnp.float32(target)
        return d * d
    if mode == "vanilla":                  # nn.BCEWithLogitsLoss vs constant target
        return (jnp.maximum(x, 0.0) - x * jnp.float32(target)
                + jnp.log1p(jnp.exp(-jnp.abs(x))))
    return x * jnp.float32(sign)           # wgangp / wganr1: +/- mean(pred)


def _gan_loss_kernel(pred_ref, out_ref, acc_ref, *, mode, target, sign,
                     rows, steps, tile_rows, first_masked_block):
    c = pl.program_id(0)                   # per-TensorCore axis (size 1 on v5e/v6e)
    j = pl.program_id(1)                   # "arbitrary" reduction axis

    @pl.when(j == 0)
    def _():
        acc_ref[...] = jnp.zeros_like(acc_ref)

    x = pred_ref[...].astype(jnp.float32)
    elem = _elementwise_loss(x, mode, target, sign)

    gblock = c * steps + j                 # unclamped global block index
    row_groups = tile_rows // 8

    # Fully-valid blocks: plain vector accumulate, no masking work at all.
    @pl.when(gblock < first_masked_block)
    def _():
        acc_ref[...] += elem.reshape(row_groups, 8, LANES).sum(axis=0)

    # Tail / overflow blocks only.  The kernel slab is row-aligned (the wrapper
    # rounds count down to a lane multiple), so a row is either fully valid or
    # fully out of range -> one iota + one compare + one select.
    @pl.when(gblock >= first_masked_block)
    def _():
        valid_rows = rows - gblock * tile_rows      # <= 0 for clamped overhang blocks
        row = jax.lax.broadcasted_iota(jnp.int32, (tile_rows, LANES), 0)
        masked = jnp.where(row < valid_rows, elem, 0.0)
        acc_ref[...] += masked.reshape(row_groups, 8, LANES).sum(axis=0)

    @pl.when(j == steps - 1)
    def _():
        out_ref[0] = acc_ref[...]          # per-core (8,128) partial sum


def _jax_scalar_loss(flat, *, mode, target, sign):
    return jnp.mean(_elementwise_loss(flat.astype(jnp.float32), mode, target, sign))


def _pallas_scalar_loss(pred, *, mode, target, sign):
    """mean(elementwise_loss(pred)) — Pallas kernel for big preds, JAX for tiny ones."""
    pred = jnp.asarray(pred)
    count = int(pred.size)
    if count == 0:
        return jnp.float32(0.0)
    flat = pred.reshape(-1)                # no astype: kernel upcasts in VMEM

    if count < MIN_KERNEL_ELEMS:
        return _jax_scalar_loss(flat, mode=mode, target=target, sign=sign)

    # Round DOWN to a lane multiple for the kernel; the <128-element ragged tail
    # is summed in plain JAX (cheaper than copying the whole prediction via pad).
    main = (count // LANES) * LANES
    tail_sum = jnp.float32(0.0)
    if main < count:
        tail_sum = jnp.sum(_elementwise_loss(
            flat[main:].astype(jnp.float32), mode, target, sign))
        flat = flat[:main]

    rows = main // LANES
    x2d = flat.reshape(rows, LANES)

    tile_rows = min(TILE_ROWS_MAX, (rows // 8) * 8)     # multiple of 8, <= rows
    blocks_total = pl.cdiv(rows, tile_rows)
    num_par = min(NUM_PARALLEL, blocks_total)           # no pointless core split
    steps = pl.cdiv(blocks_total, num_par)
    first_masked_block = rows // tile_rows              # blocks >= this need masking

    kernel = functools.partial(
        _gan_loss_kernel, mode=mode, target=float(target), sign=float(sign),
        rows=rows, steps=steps, tile_rows=tile_rows,
        first_masked_block=first_masked_block)

    def in_map(c, j):
        # Clamp any overhang of the core split onto the last real block; its
        # contribution is fully masked out inside the kernel.
        return (jnp.minimum(c * steps + j, blocks_total - 1), 0)

    if num_par > 1:
        core_par = getattr(pltpu, "CORE_PARALLEL", None) or "parallel"
        dims = (core_par, "arbitrary")
        dims_fallback = ("parallel", "arbitrary")
    else:
        dims = ("arbitrary", "arbitrary")
        dims_fallback = dims

    transcendentals = 2 * count if mode == "vanilla" else 0
    cost = pl.CostEstimate(
        flops=3 * count,
        transcendentals=transcendentals,
        bytes_accessed=count * int(pred.dtype.itemsize) + num_par * 8 * LANES * 4)

    def run(pipeline_mode, dim_sem):
        if pipeline_mode is None:
            in_spec = pl.BlockSpec((tile_rows, LANES), in_map)
        else:
            in_spec = pl.BlockSpec((tile_rows, LANES), in_map,
                                   pipeline_mode=pipeline_mode)
        return pl.pallas_call(
            kernel,
            out_shape=jax.ShapeDtypeStruct((num_par, 8, LANES), jnp.float32),
            grid_spec=pltpu.PrefetchScalarGridSpec(
                num_scalar_prefetch=0,
                grid=(num_par, steps),
                in_specs=[in_spec],
                out_specs=pl.BlockSpec((1, 8, LANES), lambda c, j: (c, 0, 0)),
                scratch_shapes=[pltpu.VMEM((8, LANES), jnp.float32)],
            ),
            compiler_params=pltpu.CompilerParams(dimension_semantics=dim_sem),
            cost_estimate=cost,
        )(x2d)

    try:
        # 3-deep input pipelining hides DMA-issue latency at grid-step boundaries.
        partials = run(pl.Buffered(3), dims)
    except Exception:
        # Conservative fallback: default double buffering + plain semantics.
        partials = run(None, dims_fallback)

    return (jnp.sum(partials) + tail_sum) / jnp.float32(count)


class GANLoss:
    """JAX/Pallas port of the PyTorch GANLoss module (forward semantics only)."""

    def __init__(self, gan_mode="lsgan", target_real_label=1.0, target_fake_label=0.0):
        self.real_label = float(target_real_label)
        self.fake_label = float(target_fake_label)
        self.gan_mode = gan_mode
        if gan_mode not in ("lsgan", "vanilla", "wgangp", "wganr1"):
            raise NotImplementedError("gan mode %s not implemented" % gan_mode)

    def _supervised_loss(self, pred, target_is_real):
        target = self.real_label if target_is_real else self.fake_label
        return _pallas_scalar_loss(pred, mode=self.gan_mode, target=target, sign=1.0)

    def __call__(self, input, target_is_real: bool):
        return self.forward(input, target_is_real)

    def forward(self, input, target_is_real: bool):
        if not isinstance(input, (list, tuple)) and input.shape[0] == 0:
            # PyTorch returns Python int 0 here; return a f32 scalar for dtype
            # consistency with every other path (jit/grad friendliness).
            return jnp.float32(0.0)
        if isinstance(input[0], (list, tuple)):
            # multi-scale discriminator: list of lists, last entry is the prediction
            loss = jnp.float32(0.0)
            for input_i in input:
                pred = input_i[-1]
                if self.gan_mode in ("lsgan", "vanilla"):
                    loss = loss + self._supervised_loss(pred, target_is_real)
                elif target_is_real:
                    loss = loss + _pallas_scalar_loss(
                        pred, mode=self.gan_mode, target=0.0, sign=-1.0)
                else:
                    loss = loss + _pallas_scalar_loss(
                        pred, mode=self.gan_mode, target=0.0, sign=1.0)
            return loss
        else:
            # single discriminator: tensor (index last slice) or list of tensors
            pred = input[-1]
            if self.gan_mode not in ("lsgan", "vanilla"):
                # matches PyTorch: self.loss is None here and would fail
                raise NotImplementedError("loss is None for gan mode %s" % self.gan_mode)
            return self._supervised_loss(pred, target_is_real)


def _ref_loss(preds, mode, target_is_real, real_label=1.0, fake_label=0.0):
    """Pure-JAX reference for validation."""
    total = jnp.float32(0.0)
    for p in preds:
        p = p.astype(jnp.float32)
        if mode == "lsgan":
            t = real_label if target_is_real else fake_label
            total = total + jnp.mean((p - t) ** 2)
        elif mode == "vanilla":
            t = real_label if target_is_real else fake_label
            total = total + jnp.mean(
                jnp.maximum(p, 0.0) - p * t + jnp.log1p(jnp.exp(-jnp.abs(p))))
        else:
            total = total + (-jnp.mean(p) if target_is_real else jnp.mean(p))
    return total


if __name__ == "__main__":
    key = jax.random.PRNGKey(0)
    k1, k2, k3, k4, k5 = jax.random.split(key, 5)

    # Two discriminator scales (NCHW conv outputs), final patch prediction last.
    # pred0 (32768 elems) takes the Pallas kernel path (lane-exact, no masking);
    # pred1 (128 elems) exercises the small-size pure-JAX fallback;
    # pred2 (20000 elems) exercises the masked last block + <128-elem JAX tail.
    feat0 = jax.random.normal(k1, (2, 4, 16, 16), dtype=jnp.float32)
    pred0 = jax.random.normal(k2, (2, 1, 128, 128), dtype=jnp.float32)
    feat1 = jax.random.normal(k3, (2, 4, 8, 8), dtype=jnp.float32)
    pred1 = jax.random.normal(k4, (2, 1, 8, 8), dtype=jnp.float32)
    pred2 = jax.random.normal(k5, (2, 1, 100, 100), dtype=jnp.float32)
    multi_scale_input = [[feat0, pred0], [feat1, pred1]]

    ok = True
    for mode in ("lsgan", "vanilla", "wgangp"):
        crit = GANLoss(gan_mode=mode)
        for target_is_real in (True, False):
            out = jax.block_until_ready(crit(multi_scale_input, target_is_real))
            ref = _ref_loss([pred0, pred1], mode, target_is_real)
            if not jnp.allclose(out, ref, atol=1e-4, rtol=1e-4):
                ok = False

    # Single-discriminator (list of tensors) path, lsgan — also hits the kernel.
    crit = GANLoss(gan_mode="lsgan")
    out_single = jax.block_until_ready(crit([feat0, pred0], True))
    ref_single = _ref_loss([pred0], "lsgan", True)
    if not jnp.allclose(out_single, ref_single, atol=1e-4, rtol=1e-4):
        ok = False

    # Ragged prediction size: masked last block in-kernel + tiny JAX tail sum.
    out_ragged = jax.block_until_ready(
        GANLoss(gan_mode="vanilla")([[feat0, pred2]], False))
    ref_ragged = _ref_loss([pred2], "vanilla", False)
    if not jnp.allclose(out_ragged, ref_ragged, atol=1e-4, rtol=1e-4):
        ok = False

    if ok:
        print("KERNEL_OK")
</pallas_src>

<mosaic_0001>
module attributes {stable_mosaic.version = 11 : i64} {
  func.func @_gan_loss_kernel(%arg0: i32, %arg1: i32, %arg2: memref<256x128xf32, #tpu.memory_space<vmem>>, %arg3: memref<1x8x128xf32, #tpu.memory_space<vmem>>, %arg4: memref<8x128xf32, #tpu.memory_space<vmem>>) attributes {dimension_semantics = [#tpu.dimension_semantics<arbitrary>, #tpu.dimension_semantics<arbitrary>], iteration_bounds = array<i64: 1, 1>, scalar_prefetch = 0 : i64, scratch_operands = 1 : i64, tpu.core_type = #tpu.core_type<tc>, window_params = [{transform_indices = @transform_0, window_bounds = array<i64: 256, 128>}, {transform_indices = @transform_1, window_bounds = array<i64: 1, 8, 128>}]} {
    %c0_i32 = arith.constant 0 : i32
    %0 = arith.cmpi eq, %arg1, %c0_i32 : i32
    %1 = arith.extui %0 : i1 to i32
    %c0_i32_0 = arith.constant 0 : i32
    %2 = arith.cmpi ne, %1, %c0_i32_0 : i32
    scf.if %2 {
      %cst_8 = arith.constant 0.000000e+00 : f32
      %18 = vector.broadcast %cst_8 : f32 to vector<8x128xf32>
      %c0_9 = arith.constant 0 : index
      %c0_10 = arith.constant 0 : index
      %19 = vector.load %arg4[%c0_9, %c0_10] : memref<8x128xf32, #tpu.memory_space<vmem>>, vector<8x128xf32>
      tpu.vector_store %arg4[%c0_9, %c0_10], %18 {strides = array<i32>} : memref<8x128xf32, #tpu.memory_space<vmem>>, vector<8x128xf32>,
    } else {
    }
    %c0 = arith.constant 0 : index
    %c0_1 = arith.constant 0 : index
    %3 = vector.load %arg2[%c0, %c0_1] : memref<256x128xf32, #tpu.memory_space<vmem>>, vector<256x128xf32>
    %cst = arith.constant 1.000000e+00 : f32
    %4 = vector.broadcast %cst : f32 to vector<256x128xf32>
    %5 = arith.subf %3, %4 : vector<256x128xf32>
    %6 = arith.mulf %5, %5 : vector<256x128xf32>
    %c1_i32 = arith.constant 1 : i32
    %7 = arith.muli %arg0, %c1_i32 : i32
    %8 = arith.addi %7, %arg1 : i32
    %c1_i32_2 = arith.constant 1 : i32
    %9 = arith.cmpi slt, %8, %c1_i32_2 : i32
    %10 = arith.extui %9 : i1 to i32
    %c0_i32_3 = arith.constant 0 : i32
    %11 = arith.cmpi ne, %10, %c0_i32_3 : i32
    scf.if %11 {
      %c0_8 = arith.constant 0 : index
      %c0_9 = arith.constant 0 : index
      %18 = vector.load %arg4[%c0_8, %c0_9] : memref<8x128xf32, #tpu.memory_space<vmem>>, vector<8x128xf32>
      %19 = vector.shape_cast %6 : vector<256x128xf32> to vector<32x8x128xf32>
      %cst_10 = arith.constant dense<0.000000e+00> : vector<8x128xf32>
      %20 = vector.multi_reduction <add>, %19, %cst_10 [0] : vector<32x8x128xf32> to vector<8x128xf32>
      %21 = arith.addf %18, %20 : vector<8x128xf32>
      %c0_11 = arith.constant 0 : index
      %c0_12 = arith.constant 0 : index
      %22 = vector.load %arg4[%c0_11, %c0_12] : memref<8x128xf32, #tpu.memory_space<vmem>>, vector<8x128xf32>
      tpu.vector_store %arg4[%c0_11, %c0_12], %21 {strides = array<i32>} : memref<8x128xf32, #tpu.memory_space<vmem>>, vector<8x128xf32>,
    } else {
    }
    %c1_i32_4 = arith.constant 1 : i32
    %12 = arith.cmpi sge, %8, %c1_i32_4 : i32
    %13 = arith.extui %12 : i1 to i32
    %c0_i32_5 = arith.constant 0 : i32
    %14 = arith.cmpi ne, %13, %c0_i32_5 : i32
    scf.if %14 {
      %c256_i32 = arith.constant 256 : i32
      %18 = arith.muli %8, %c256_i32 : i32
      %c256_i32_8 = arith.constant 256 : i32
      %19 = arith.subi %c256_i32_8, %18 : i32
      %20 = tpu.iota {dimensions = array<i32: 0>} : vector<256x128xi32>
      %21 = vector.broadcast %19 : i32 to vector<256x128xi32>
      %22 = arith.cmpi slt, %20, %21 : vector<256x128xi32>
      %cst_9 = arith.constant 0.000000e+00 : f32
      %23 = vector.broadcast %cst_9 : f32 to vector<256x128xf32>
      %24 = arith.select %22, %6, %23 : vector<256x128xi1>, vector<256x128xf32>
      %c0_10 = arith.constant 0 : index
      %c0_11 = arith.constant 0 : index
      %25 = vector.load %arg4[%c0_10, %c0_11] : memref<8x128xf32, #tpu.memory_space<vmem>>, vector<8x128xf32>
      %26 = vector.shape_cast %24 : vector<256x128xf32> to vector<32x8x128xf32>
      %cst_12 = arith.constant dense<0.000000e+00> : vector<8x128xf32>
      %27 = vector.multi_reduction <add>, %26, %cst_12 [0] : vector<32x8x128xf32> to vector<8x128xf32>
      %28 = arith.addf %25, %27 : vector<8x128xf32>
      %c0_13 = arith.constant 0 : index
      %c0_14 = arith.constant 0 : index
      %29 = vector.load %arg4[%c0_13, %c0_14] : memref<8x128xf32, #tpu.memory_space<vmem>>, vector<8x128xf32>
      tpu.vector_store %arg4[%c0_13, %c0_14], %28 {strides = array<i32>} : memref<8x128xf32, #tpu.memory_space<vmem>>, vector<8x128xf32>,
    } else {
    }
    %c0_i32_6 = arith.constant 0 : i32
    %15 = arith.cmpi eq, %arg1, %c0_i32_6 : i32
    %16 = arith.extui %15 : i1 to i32
    %c0_i32_7 = arith.constant 0 : i32
    %17 = arith.cmpi ne, %16, %c0_i32_7 : i32
    scf.if %17 {
      %c0_8 = arith.constant 0 : index
      %c0_9 = arith.constant 0 : index
      %18 = vector.load %arg4[%c0_8, %c0_9] : memref<8x128xf32, #tpu.memory_space<vmem>>, vector<8x128xf32>
      %c0_10 = arith.constant 0 : index
      %c0_11 = arith.constant 0 : index
      %c0_12 = arith.constant 0 : index
      %19 = vector.load %arg3[%c0_10, %c0_11, %c0_12] : memref<1x8x128xf32, #tpu.memory_space<vmem>>, vector<1x8x128xf32>
      %20 = vector.shape_cast %19 : vector<1x8x128xf32> to vector<8x128xf32>
      %21 = vector.shape_cast %18 : vector<8x128xf32> to vector<1x8x128xf32>
      tpu.vector_store %arg3[%c0_10, %c0_11, %c0_12], %21 {strides = array<i32>} : memref<1x8x128xf32, #tpu.memory_space<vmem>>, vector<1x8x128xf32>,
    } else {
    }
    return
  }
  func.func @transform_0(%arg0: i32, %arg1: i32) -> (i32, i32) {
    %c1_i32 = arith.constant 1 : i32
    %0 = arith.muli %arg0, %c1_i32 : i32
    %1 = arith.addi %0, %arg1 : i32
    %c0_i32 = arith.constant 0 : i32
    %2 = arith.minsi %1, %c0_i32 : i32
    %c0_i32_0 = arith.constant 0 : i32
    %c0_i32_1 = arith.constant 0 : i32
    return %2, %c0_i32_0 : i32, i32
  }
  func.func @transform_1(%arg0: i32, %arg1: i32) -> (i32, i32, i32) {
    %c0_i32 = arith.constant 0 : i32
    %c0_i32_0 = arith.constant 0 : i32
    %c0_i32_1 = arith.constant 0 : i32
    return %arg0, %c0_i32, %c0_i32_0 : i32, i32, i32
  }
}

</mosaic_0001>

<llo_original>
// kernel: tpu_custom_call.1
$region0: #{tpu_custom_call.1}
  #allocation0 [shape = 'u32[]', space=smem, size = 0x4, offset = 0x4, fixed_abs, tag = 'smem constant byte address 0x4 - core index']
  #allocation1 [shape = 'u32[72,128]{1,0:T(1,128)}', space=vmem, size = 0x9000, scoped, tag = 'internal scratch']
  #allocation2 [shape = 'f32[8,128]{1,0:T(8,128)}', space=vmem, size = 0x1000, scoped, tag = 'scratch operand']
  %s0 = inlined_call_operand.hbm [shape: f32[256,128], index: 0, kind: input, shape index: {}]
  %s1 = inlined_call_operand.hbm [shape: f32[1,8,128], index: 1, kind: output, shape index: {}]
  %s2 = sld [smem:[#allocation0]]
  $region34: #{tpu_custom_call.1} parent=0
    _
  %s4 = ssub.s32 1, %s2
  %s5 = scalar_select 0, %s4, %s2
  $region1: #{tpu_custom_call.1} parent=0
    #allocation3 [shape = 'u8[131072]{0}', space=vmem, size = 0x20000, scoped, tag = 'input window, operand 0, single buffered']
    #allocation4 [shape = 's32[1]{0}', space=sflag, size = 0x4, scoped, tag = 'scoped memory for tpu_custom_call.1']
    #allocation5 [shape = 's32[1]{0}', space=sflag, size = 0x4, scoped, tag = 'scoped memory for tpu_custom_call.1']
    #allocation6 [shape = 'u8[4096]{0}', space=vmem, size = 0x1000, scoped, tag = 'output window, operand 0, single buffered']
    %6 = vsyncpa [#allocation4], 0
    %7 = vsyncpa [#allocation5], 0
    // Predicated region
    $region2: #{tpu_custom_call.1} parent=1 // pred_check
      _
    $region3: #{tpu_custom_call.1} parent=1 // pred_check_branch
      %9 = sbr.rel (0) target = $region5
    $region4: #{tpu_custom_call.1} parent=1 // pred_region
      %s10 = sadd.s32 0, 0
      %p11 = scmp.lt.s32.totalorder %s10, 0
      %s12 = scalar_select %p11, %s10, 0
      %s13 = smul.u32 32, %s12
      %15 = vsyncadd [#allocation4], 0
      %s16 = smul.addr %s13, 8
      %s17 = scalar_lea.hbm %s0, %s16
      %s18 = sshll.u32 %s17, 4
      %s19 = int_to_ptr.hbm [resolvable:$true] %s18
      %s20 = sshll.u32 [#allocation3], 4
      %s21 = int_to_ptr.vmem [resolvable:$true] %s20
      %26 = dma.hbm_to_vmem [thread:$0]  %s19, 4096, %s21, [#allocation4], 128, 128, 8
    $region5: #{tpu_custom_call.1} parent=1 // pred_fallthru
      _
    // Predicated region
    $region6: #{tpu_custom_call.1} parent=1 // pred_check
      _
    $region7: #{tpu_custom_call.1} parent=1 // pred_check_branch
      %28 = sbr.rel (0) target = $region9
    $region8: #{tpu_custom_call.1} parent=1 // pred_region
      %30 = dma.done [#allocation4], 4096
    $region9: #{tpu_custom_call.1} parent=1 // pred_fallthru
      _
    %s31 = sadd.s32 0, 0
    %p32 = scmp.lt.s32.totalorder %s31, 0
    %s33 = scalar_select %p32, %s31, 0
    %s34 = smul.u32 32, %s33
    %p35 = scmp.eq.s32.totalorder 0, 0
    // Predicated region
    $region10: #{tpu_custom_call.1} parent=1 // pred_check
      %p36 = pneg %p35
    $region11: #{tpu_custom_call.1} parent=1 // pred_check_branch
      %38 = sbr.rel (%p36) target = $region13
    $region12: #{tpu_custom_call.1} parent=1 // pred_region
      %39 = vst [vmem:[#allocation2] sm:$0xff] 0.0
    $region13: #{tpu_custom_call.1} parent=1 // pred_fallthru
      _
    %v40 = vld [vmem:[#allocation3] sm:$0xff]
    %v41 = vld [vmem:[#allocation3 + $0x8] sm:$0xff]
    %v42 = vld [vmem:[#allocation3 + $0x10] sm:$0xff]
    %v43 = vld [vmem:[#allocation3 + $0x18] sm:$0xff]
    %v44 = vld [vmem:[#allocation3 + $0x20] sm:$0xff]
    %v45 = vld [vmem:[#allocation3 + $0x28] sm:$0xff]
    %v46 = vld [vmem:[#allocation3 + $0x30] sm:$0xff]
    %v47 = vld [vmem:[#allocation3 + $0x38] sm:$0xff]
    %v48 = vld [vmem:[#allocation3 + $0x40] sm:$0xff]
    %v49 = vld [vmem:[#allocation3 + $0x48] sm:$0xff]
    %v50 = vld [vmem:[#allocation3 + $0x50] sm:$0xff]
    %v51 = vld [vmem:[#allocation3 + $0x58] sm:$0xff]
    %v52 = vld [vmem:[#allocation3 + $0x60] sm:$0xff]
    %v53 = vld [vmem:[#allocation3 + $0x68] sm:$0xff]
    %v54 = vld [vmem:[#allocation3 + $0x70] sm:$0xff]
    %v55 = vld [vmem:[#allocation3 + $0x78] sm:$0xff]
    %v56 = vld [vmem:[#allocation3 + $0x80] sm:$0xff]
    %v57 = vld [vmem:[#allocation3 + $0x88] sm:$0xff]
    %v58 = vld [vmem:[#allocation3 + $0x90] sm:$0xff]
    %v59 = vld [vmem:[#allocation3 + $0x98] sm:$0xff]
    %v60 = vld [vmem:[#allocation3 + $0xa0] sm:$0xff]
    %v61 = vld [vmem:[#allocation3 + $0xa8] sm:$0xff]
    %v62 = vld [vmem:[#allocation3 + $0xb0] sm:$0xff]
    %v63 = vld [vmem:[#allocation3 + $0xb8] sm:$0xff]
    %v64 = vld [vmem:[#allocation3 + $0xc0] sm:$0xff]
    %v65 = vld [vmem:[#allocation3 + $0xc8] sm:$0xff]
    %v66 = vld [vmem:[#allocation3 + $0xd0] sm:$0xff]
    %v67 = vld [vmem:[#allocation3 + $0xd8] sm:$0xff]
    %v68 = vld [vmem:[#allocation3 + $0xe0] sm:$0xff]
    %v69 = vld [vmem:[#allocation3 + $0xe8] sm:$0xff]
    %v70 = vld [vmem:[#allocation3 + $0xf0] sm:$0xff]
    %v71 = vld [vmem:[#allocation3 + $0xf8] sm:$0xff]
    %v72 = vsub.f32 %v40, 1.0
    %v73 = vsub.f32 %v41, 1.0
    %v74 = vsub.f32 %v42, 1.0
    %v75 = vsub.f32 %v43, 1.0
    %v76 = vsub.f32 %v44, 1.0
    %v77 = vsub.f32 %v45, 1.0
    %v78 = vsub.f32 %v46, 1.0
    %v79 = vsub.f32 %v47, 1.0
    %v80 = vsub.f32 %v48, 1.0
    %v81 = vsub.f32 %v49, 1.0
    %v82 = vsub.f32 %v50, 1.0
    %v83 = vsub.f32 %v51, 1.0
    %v84 = vsub.f32 %v52, 1.0
    %v85 = vsub.f32 %v53, 1.0
    %v86 = vsub.f32 %v54, 1.0
    %v87 = vsub.f32 %v55, 1.0
    %v88 = vsub.f32 %v56, 1.0
    %v89 = vsub.f32 %v57, 1.0
    %v90 = vsub.f32 %v58, 1.0
    %v91 = vsub.f32 %v59, 1.0
    %v92 = vsub.f32 %v60, 1.0
    %v93 = vsub.f32 %v61, 1.0
    %v94 = vsub.f32 %v62, 1.0
    %v95 = vsub.f32 %v63, 1.0
    %v96 = vsub.f32 %v64, 1.0
    %v97 = vsub.f32 %v65, 1.0
    %v98 = vsub.f32 %v66, 1.0
    %v99 = vsub.f32 %v67, 1.0
    %v100 = vsub.f32 %v68, 1.0
    %v101 = vsub.f32 %v69, 1.0
    %v102 = vsub.f32 %v70, 1.0
    %v103 = vsub.f32 %v71, 1.0
    %v104 = vmul.f32 %v72, %v72
    %v105 = vmul.f32 %v73, %v73
    %v106 = vmul.f32 %v74, %v74
    %v107 = vmul.f32 %v75, %v75
    %v108 = vmul.f32 %v76, %v76
    %v109 = vmul.f32 %v77, %v77
    %v110 = vmul.f32 %v78, %v78
    %v111 = vmul.f32 %v79, %v79
    %v112 = vmul.f32 %v80, %v80
    %v113 = vmul.f32 %v81, %v81
    %v114 = vmul.f32 %v82, %v82
    %v115 = vmul.f32 %v83, %v83
    %v116 = vmul.f32 %v84, %v84
    %v117 = vmul.f32 %v85, %v85
    %v118 = vmul.f32 %v86, %v86
    %v119 = vmul.f32 %v87, %v87
    %v120 = vmul.f32 %v88, %v88
    %v121 = vmul.f32 %v89, %v89
    %v122 = vmul.f32 %v90, %v90
    %v123 = vmul.f32 %v91, %v91
    %v124 = vmul.f32 %v92, %v92
    %v125 = vmul.f32 %v93, %v93
    %v126 = vmul.f32 %v94, %v94
    %v127 = vmul.f32 %v95, %v95
    %v128 = vmul.f32 %v96, %v96
    %v129 = vmul.f32 %v97, %v97
    %v130 = vmul.f32 %v98, %v98
    %v131 = vmul.f32 %v99, %v99
    %v132 = vmul.f32 %v100, %v100
    %v133 = vmul.f32 %v101, %v101
    %v134 = vmul.f32 %v102, %v102
    %v135 = vmul.f32 %v103, %v103
    %s136 = sadd.s32 0, 0
    %p137 = scmp.lt.s32.totalorder %s136, 1
    // Predicated region
    $region14: #{tpu_custom_call.1} parent=1 // pred_check
      %p138 = pneg %p137
    $region15: #{tpu_custom_call.1} parent=1 // pred_check_branch
      %140 = sbr.rel (%p138) target = $region17
    $region16: #{tpu_custom_call.1} parent=1 // pred_region
      %v141 = vld [vmem:[#allocation2] sm:$0xff]
      %v142 = vadd.f32 %v104, %v105
      %v143 = vadd.f32 %v142, %v106
      %v144 = vadd.f32 %v143, %v107
      %v145 = vadd.f32 %v144, %v108
      %v146 = vadd.f32 %v145, %v109
      %v147 = vadd.f32 %v146, %v110
      %v148 = vadd.f32 %v147, %v111
      %v149 = vadd.f32 %v148, %v112
      %v150 = vadd.f32 %v149, %v113
      %v151 = vadd.f32 %v150, %v114
      %v152 = vadd.f32 %v151, %v115
      %v153 = vadd.f32 %v152, %v116
      %v154 = vadd.f32 %v153, %v117
      %v155 = vadd.f32 %v154, %v118
      %v156 = vadd.f32 %v155, %v119
      %v157 = vadd.f32 %v156, %v120
      %v158 = vadd.f32 %v157, %v121
      %v159 = vadd.f32 %v158, %v122
      %v160 = vadd.f32 %v159, %v123
      %v161 = vadd.f32 %v160, %v124
      %v162 = vadd.f32 %v161, %v125
      %v163 = vadd.f32 %v162, %v126
      %v164 = vadd.f32 %v163, %v127
      %v165 = vadd.f32 %v164, %v128
      %v166 = vadd.f32 %v165, %v129
      %v167 = vadd.f32 %v166, %v130
      %v168 = vadd.f32 %v167, %v131
      %v169 = vadd.f32 %v168, %v132
      %v170 = vadd.f32 %v169, %v133
      %v171 = vadd.f32 %v170, %v134
      %v172 = vadd.f32 %v171, %v135
      %v173 = vadd.f32 %v141, %v172
      %174 = vst [vmem:[#allocation2] sm:$0xff] %v173
    $region17: #{tpu_custom_call.1} parent=1 // pred_fallthru
      _
    %p175 = scmp.ge.s32.totalorder %s136, 1
    // Predicated region
    $region18: #{tpu_custom_call.1} parent=1 // pred_check
      %p176 = pneg %p175
    $region19: #{tpu_custom_call.1} parent=1 // pred_check_branch
      %178 = sbr.rel (%p176) target = $region21
    $region20: #{tpu_custom_call.1} parent=1 // pred_region
      %s179 = smul.u32 %s136, 256
      %s180 = ssub.s32 256, %s179
      %v181 = vlaneseq
      %v182 = vshrl.u32 %v181, 7
      %v183 = vadd.s32 %v182, 8
      %v184 = vadd.s32 %v182, 16
      %v185 = vadd.s32 %v182, 24
      %v186 = vadd.s32 %v182, 32
      %v187 = vadd.s32 %v182, 40
      %v188 = vadd.s32 %v182, 48
      %v189 = vadd.s32 %v182, 56
      %v190 = vadd.s32 %v182, 64
      %v191 = vadd.s32 %v182, 72
      %v192 = vadd.s32 %v182, 80
      %v193 = vadd.s32 %v182, 88
      %v194 = vadd.s32 %v182, 96
      %v195 = vadd.s32 %v182, 104
      %v196 = vadd.s32 %v182, 112
      %v197 = vadd.s32 %v182, 120
      %v198 = vadd.s32 %v182, 128
      %v199 = vadd.s32 %v182, 136
      %v200 = vadd.s32 %v182, 144
      %v201 = vadd.s32 %v182, 152
      %v202 = vadd.s32 %v182, 160
      %v203 = vadd.s32 %v182, 168
      %v204 = vadd.s32 %v182, 176
      %v205 = vadd.s32 %v182, 184
      %v206 = vadd.s32 %v182, 192
      %v207 = vadd.s32 %v182, 200
      %v208 = vadd.s32 %v182, 208
      %v209 = vadd.s32 %v182, 216
      %v210 = vadd.s32 %v182, 224
      %v211 = vadd.s32 %v182, 232
      %v212 = vadd.s32 %v182, 240
      %v213 = vadd.s32 %v182, 248
      %v214 = vstv %s180
      %vm215 = vcmp.lt.s32.totalorder %v182, %v214
      %vm216 = vcmp.lt.s32.totalorder %v183, %v214
      %vm217 = vcmp.lt.s32.totalorder %v184, %v214
      %vm218 = vcmp.lt.s32.totalorder %v185, %v214
      %vm219 = vcmp.lt.s32.totalorder %v186, %v214
      %vm220 = vcmp.lt.s32.totalorder %v187, %v214
      %vm221 = vcmp.lt.s32.totalorder %v188, %v214
      %vm222 = vcmp.lt.s32.totalorder %v189, %v214
      %vm223 = vcmp.lt.s32.totalorder %v190, %v214
      %vm224 = vcmp.lt.s32.totalorder %v191, %v214
      %vm225 = vcmp.lt.s32.totalorder %v192, %v214
      %vm226 = vcmp.lt.s32.totalorder %v193, %v214
      %vm227 = vcmp.lt.s32.totalorder %v194, %v214
      %vm228 = vcmp.lt.s32.totalorder %v195, %v214
      %vm229 = vcmp.lt.s32.totalorder %v196, %v214
      %vm230 = vcmp.lt.s32.totalorder %v197, %v214
      %vm231 = vcmp.lt.s32.totalorder %v198, %v214
      %vm232 = vcmp.lt.s32.totalorder %v199, %v214
      %vm233 = vcmp.lt.s32.totalorder %v200, %v214
      %vm234 = vcmp.lt.s32.totalorder %v201, %v214
      %vm235 = vcmp.lt.s32.totalorder %v202, %v214
      %vm236 = vcmp.lt.s32.totalorder %v203, %v214
      %vm237 = vcmp.lt.s32.totalorder %v204, %v214
      %vm238 = vcmp.lt.s32.totalorder %v205, %v214
      %vm239 = vcmp.lt.s32.totalorder %v206, %v214
      %vm240 = vcmp.lt.s32.totalorder %v207, %v214
      %vm241 = vcmp.lt.s32.totalorder %v208, %v214
      %vm242 = vcmp.lt.s32.totalorder %v209, %v214
      %vm243 = vcmp.lt.s32.totalorder %v210, %v214
      %vm244 = vcmp.lt.s32.totalorder %v211, %v214
      %vm245 = vcmp.lt.s32.totalorder %v212, %v214
      %vm246 = vcmp.lt.s32.totalorder %v213, %v214
      %v247 = vsel %vm215, %v104, 0.0
      %v248 = vsel %vm216, %v105, 0.0
      %v249 = vsel %vm217, %v106, 0.0
      %v250 = vsel %vm218, %v107, 0.0
      %v251 = vsel %vm219, %v108, 0.0
      %v252 = vsel %vm220, %v109, 0.0
      %v253 = vsel %vm221, %v110, 0.0
      %v254 = vsel %vm222, %v111, 0.0
      %v255 = vsel %vm223, %v112, 0.0
      %v256 = vsel %vm224, %v113, 0.0
      %v257 = vsel %vm225, %v114, 0.0
      %v258 = vsel %vm226, %v115, 0.0
      %v259 = vsel %vm227, %v116, 0.0
      %v260 = vsel %vm228, %v117, 0.0
      %v261 = vsel %vm229, %v118, 0.0
      %v262 = vsel %vm230, %v119, 0.0
      %v263 = vsel %vm231, %v120, 0.0
      %v264 = vsel %vm232, %v121, 0.0
      %v265 = vsel %vm233, %v122, 0.0
      %v266 = vsel %vm234, %v123, 0.0
      %v267 = vsel %vm235, %v124, 0.0
      %v268 = vsel %vm236, %v125, 0.0
      %v269 = vsel %vm237, %v126, 0.0
      %v270 = vsel %vm238, %v127, 0.0
      %v271 = vsel %vm239, %v128, 0.0
      %v272 = vsel %vm240, %v129, 0.0
      %v273 = vsel %vm241, %v130, 0.0
      %v274 = vsel %vm242, %v131, 0.0
      %v275 = vsel %vm243, %v132, 0.0
      %v276 = vsel %vm244, %v133, 0.0
      %v277 = vsel %vm245, %v134, 0.0
      %v278 = vsel %vm246, %v135, 0.0
      %v279 = vld [vmem:[#allocation2] sm:$0xff]
      %v280 = vadd.f32 %v247, %v248
      %v281 = vadd.f32 %v280, %v249
      %v282 = vadd.f32 %v281, %v250
      %v283 = vadd.f32 %v282, %v251
      %v284 = vadd.f32 %v283, %v252
      %v285 = vadd.f32 %v284, %v253
      %v286 = vadd.f32 %v285, %v254
      %v287 = vadd.f32 %v286, %v255
      %v288 = vadd.f32 %v287, %v256
      %v289 = vadd.f32 %v288, %v257
      %v290 = vadd.f32 %v289, %v258
      %v291 = vadd.f32 %v290, %v259
      %v292 = vadd.f32 %v291, %v260
      %v293 = vadd.f32 %v292, %v261
      %v294 = vadd.f32 %v293, %v262
      %v295 = vadd.f32 %v294, %v263
      %v296 = vadd.f32 %v295, %v264
      %v297 = vadd.f32 %v296, %v265
      %v298 = vadd.f32 %v297, %v266
      %v299 = vadd.f32 %v298, %v267
      %v300 = vadd.f32 %v299, %v268
      %v301 = vadd.f32 %v300, %v269
      %v302 = vadd.f32 %v301, %v270
      %v303 = vadd.f32 %v302, %v271
      %v304 = vadd.f32 %v303, %v272
      %v305 = vadd.f32 %v304, %v273
      %v306 = vadd.f32 %v305, %v274
      %v307 = vadd.f32 %v306, %v275
      %v308 = vadd.f32 %v307, %v276
      %v309 = vadd.f32 %v308, %v277
      %v310 = vadd.f32 %v309, %v278
      %v311 = vadd.f32 %v279, %v310
      %312 = vst [vmem:[#allocation2] sm:$0xff] %v311
    $region21: #{tpu_custom_call.1} parent=1 // pred_fallthru
      _
    // Predicated region
    $region22: #{tpu_custom_call.1} parent=1 // pred_check
      %p313 = pneg %p35
    $region23: #{tpu_custom_call.1} parent=1 // pred_check_branch
      %315 = sbr.rel (%p313) target = $region25
    $region24: #{tpu_custom_call.1} parent=1 // pred_region
      %v316 = vld [vmem:[#allocation2] sm:$0xff]
      %317 = vst [vmem:[#allocation6] sm:$0xff] %v316
    $region25: #{tpu_custom_call.1} parent=1 // pred_fallthru
      _
    // Predicated region
    $region26: #{tpu_custom_call.1} parent=1 // pred_check
      _
    $region27: #{tpu_custom_call.1} parent=1 // pred_check_branch
      %319 = sbr.rel (0) target = $region29
    $region28: #{tpu_custom_call.1} parent=1 // pred_region
      %321 = vsyncadd [#allocation5], 0
      %s323 = sshll.u32 [#allocation6], 4
      %s324 = int_to_ptr.vmem [resolvable:$true] %s323
      %s325 = sshll.u32 %s1, 4
      %s326 = int_to_ptr.hbm [resolvable:$true] %s325
      %328 = dma.vmem_to_hbm [thread:$0]  %s324, 128, %s326, [#allocation5]
    $region29: #{tpu_custom_call.1} parent=1 // pred_fallthru
      _
    // Predicated region
    $region30: #{tpu_custom_call.1} parent=1 // pred_check
      _
    $region31: #{tpu_custom_call.1} parent=1 // pred_check_branch
      %330 = sbr.rel (0) target = $region33
    $region32: #{tpu_custom_call.1} parent=1 // pred_region
      %332 = dma.done [#allocation5], 128
    $region33: #{tpu_custom_call.1} parent=1 // pred_fallthru
      _
    %333 = vsyncpa [#allocation4], 1
    %334 = vsyncpa [#allocation5], 1

</llo_original>
